<compile_context>
chip_gen: v6e
topology: v6e:2x2x1
jax: 0.10.0
libtpu: 0.0.40
codegen_flags: <defaults>
</compile_context>

<pallas_src>
import jax
import jax.numpy as jnp
from jax import lax
from jax.experimental import pallas as pl
from jax.experimental.pallas import tpu as pltpu

KH = KW = 5
PAD = 2
C_IN = 3
C_OUT = 32
KK = KH * KW * C_IN          # 75 = im2col contraction depth


def _fused_conv_kernel(p_ref, w_ref, b_ref, o_ref):
    """One grid step = (batch n, pixel tile t).

    p_ref : (1, KK, TP)    im2col patch columns for TP output pixels (VMEM)
    w_ref : (C_OUT, KK)    fused (5x5 with the 1x1 folded into center tap)
    b_ref : (C_OUT, 1)     fused bias (b5 - b1), f32
    o_ref : (1, C_OUT, TP) output pixels, already in NCHW order
    """
    acc = jnp.dot(w_ref[...], p_ref[0],
                  preferred_element_type=jnp.float32)      # (C_OUT, TP) on MXU
    acc = acc + b_ref[...]                                 # broadcast over lanes
    o_ref[0] = jnp.maximum(acc, 0.0).astype(o_ref.dtype)


def _pick_pixel_tile(total):
    """Largest lane-dense tile (multiple of 128) that divides H*W, capped at 512."""
    for t in (512, 256, 128):
        if total % t == 0:
            return t
    return total if total <= 512 else 128   # cdiv grid handles the remainder


def fused_conv_sub_relu(x_nchw, w5_hwio, b5, w1_io, b1,
                        compute_dtype=jnp.float32):
    """relu(conv5x5(x) - conv1x1(x)) as one fused Pallas matmul kernel.

    x_nchw: (N, 3, H, W) float32 (PyTorch NCHW convention).
    Returns (N, 32, H, W) float32.
    compute_dtype=jnp.bfloat16 halves im2col HBM traffic and doubles MXU
    throughput (mainly a v5e win) at reduced precision.
    """
    N, C, H, W = x_nchw.shape
    assert C == C_IN
    P = H * W
    TP = _pick_pixel_tile(P)
    n_tiles = pl.cdiv(P, TP)

    # -- algebraic fusion: relu(conv5(x) - conv1(x)) == relu(conv5_fused(x))
    #    because the 1x1 conv reads exactly the center tap of the 5x5 window.
    w_fused = w5_hwio.at[PAD, PAD].add(-w1_io)             # (KH, KW, C_IN, C_OUT)
    w_flat_t = w_fused.reshape(KK, C_OUT).T                # (C_OUT, KK)
    b_2d = (b5 - b1).reshape(C_OUT, 1).astype(jnp.float32)

    # -- wrapper-side im2col (lane-dense operand for the kernel):
    #    patches[n, (kh*KW+kw)*C_IN + c, h*W + w] = x_pad[n, c, h+kh, w+kw]
    x_pad = jnp.pad(x_nchw, ((0, 0), (0, 0), (PAD, PAD), (PAD, PAD)))
    taps = [x_pad[:, :, kh:kh + H, kw:kw + W]
            for kh in range(KH) for kw in range(KW)]        # 25 x (N, C, H, W)
    patches = jnp.stack(taps, axis=1).reshape(N, KK, P)     # (N, 75, H*W)

    patches = patches.astype(compute_dtype)
    w_flat_t = w_flat_t.astype(compute_dtype)

    out_flat = pl.pallas_call(
        _fused_conv_kernel,
        out_shape=jax.ShapeDtypeStruct((N, C_OUT, P), jnp.float32),
        grid_spec=pltpu.PrefetchScalarGridSpec(
            num_scalar_prefetch=0,
            grid=(N, n_tiles),
            in_specs=[
                pl.BlockSpec((1, KK, TP), lambda n, t: (n, 0, t)),
                pl.BlockSpec((C_OUT, KK), lambda n, t: (0, 0)),   # resident
                pl.BlockSpec((C_OUT, 1), lambda n, t: (0, 0)),    # resident
            ],
            out_specs=pl.BlockSpec((1, C_OUT, TP), lambda n, t: (n, 0, t)),
        ),
        compiler_params=pltpu.CompilerParams(
            dimension_semantics=("parallel", "parallel")),
    )(patches, w_flat_t, b_2d)

    # Already NCHW -- only a free reshape back to (N, C_OUT, H, W).
    return out_flat.reshape(N, C_OUT, H, W)


def _reference(x_nchw, w5_hwio, b5, w1_io, b1):
    """Pure-JAX (lax.conv) reference: unfused relu(conv5x5 - conv1x1)."""
    w5_oihw = jnp.transpose(w5_hwio, (3, 2, 0, 1))            # (O, I, KH, KW)
    w1_oihw = jnp.transpose(w1_io, (1, 0))[:, :, None, None]  # (O, I, 1, 1)
    v1 = lax.conv_general_dilated(
        x_nchw, w5_oihw, window_strides=(1, 1),
        padding=((PAD, PAD), (PAD, PAD)),
        dimension_numbers=("NCHW", "OIHW", "NCHW"),
    ) + b5[None, :, None, None]
    v2 = lax.conv_general_dilated(
        x_nchw, w1_oihw, window_strides=(1, 1), padding="VALID",
        dimension_numbers=("NCHW", "OIHW", "NCHW"),
    ) + b1[None, :, None, None]
    return jnp.maximum(v1 - v2, 0.0)


if __name__ == "__main__":
    key = jax.random.PRNGKey(0)
    k_x, k_w5, k_b5, k_w1, k_b1 = jax.random.split(key, 5)

    # Small shapes consistent with the module: NCHW input, 3 channels.
    N, H, W = 2, 16, 16
    x = jax.random.normal(k_x, (N, C_IN, H, W), dtype=jnp.float32)

    # Deterministic parameter init (synthetic, not a checkpoint).
    w5 = jax.random.normal(k_w5, (KH, KW, C_IN, C_OUT), dtype=jnp.float32) * 0.1
    b5 = jax.random.normal(k_b5, (C_OUT,), dtype=jnp.float32) * 0.1
    w1 = jax.random.normal(k_w1, (C_IN, C_OUT), dtype=jnp.float32) * 0.1
    b1 = jax.random.normal(k_b1, (C_OUT,), dtype=jnp.float32) * 0.1

    fused = jax.jit(fused_conv_sub_relu)
    out = jax.block_until_ready(fused(x, w5, b5, w1, b1))

    ref = jax.block_until_ready(_reference(x, w5, b5, w1, b1))
    assert out.shape == (N, C_OUT, H, W)
    # Center-tap fusion + im2col change the fp summation order -> tolerance check.
    assert jnp.allclose(out, ref, atol=1e-4, rtol=1e-4), (
        float(jnp.max(jnp.abs(out - ref))))

    print("KERNEL_OK")
</pallas_src>

<mosaic_0001>
module attributes {stable_mosaic.version = 11 : i64} {
  func.func @_fused_conv_kernel(%arg0: i32, %arg1: i32, %arg2: memref<1x75x256xf32, #tpu.memory_space<vmem>>, %arg3: memref<32x75xf32, #tpu.memory_space<vmem>>, %arg4: memref<32x1xf32, #tpu.memory_space<vmem>>, %arg5: memref<1x32x256xf32, #tpu.memory_space<vmem>>) attributes {dimension_semantics = [#tpu.dimension_semantics<parallel>, #tpu.dimension_semantics<parallel>], iteration_bounds = array<i64: 2, 1>, scalar_prefetch = 0 : i64, scratch_operands = 0 : i64, tpu.core_type = #tpu.core_type<tc>, window_params = [{transform_indices = @transform_0, window_bounds = array<i64: 1, 75, 256>}, {pipeline_mode = #tpu.pipeline_mode<synchronous>, transform_indices = @transform_1, window_bounds = array<i64: 32, 75>}, {pipeline_mode = #tpu.pipeline_mode<synchronous>, transform_indices = @transform_2, window_bounds = array<i64: 32, 1>}, {transform_indices = @transform_3, window_bounds = array<i64: 1, 32, 256>}]} {
    %c0 = arith.constant 0 : index
    %c0_0 = arith.constant 0 : index
    %0 = vector.load %arg3[%c0, %c0_0] : memref<32x75xf32, #tpu.memory_space<vmem>>, vector<32x75xf32>
    %c0_1 = arith.constant 0 : index
    %c0_2 = arith.constant 0 : index
    %c0_3 = arith.constant 0 : index
    %1 = vector.load %arg2[%c0_1, %c0_2, %c0_3] : memref<1x75x256xf32, #tpu.memory_space<vmem>>, vector<1x75x256xf32>
    %2 = vector.shape_cast %1 : vector<1x75x256xf32> to vector<75x256xf32>
    %cst = arith.constant dense<0.000000e+00> : vector<32x256xf32>
    %3 = tpu.matmul %0, %2, %cst {dimension_numbers = #tpu.dot_dimension_numbers<[1], [0], [0], [1], [0, 0, 1, 1], [], []>} : vector<32x75xf32>, vector<75x256xf32>, vector<32x256xf32> -> vector<32x256xf32>
    %c0_4 = arith.constant 0 : index
    %c0_5 = arith.constant 0 : index
    %4 = vector.load %arg4[%c0_4, %c0_5] : memref<32x1xf32, #tpu.memory_space<vmem>>, vector<32x1xf32>
    %5 = vector.broadcast %4 : vector<32x1xf32> to vector<32x256xf32>
    %6 = arith.addf %3, %5 : vector<32x256xf32>
    %cst_6 = arith.constant 0.000000e+00 : f32
    %7 = vector.broadcast %cst_6 : f32 to vector<32x256xf32>
    %8 = arith.maximumf %6, %7 : vector<32x256xf32>
    %c0_7 = arith.constant 0 : index
    %c0_8 = arith.constant 0 : index
    %c0_9 = arith.constant 0 : index
    %9 = vector.load %arg5[%c0_7, %c0_8, %c0_9] : memref<1x32x256xf32, #tpu.memory_space<vmem>>, vector<1x32x256xf32>
    %10 = vector.shape_cast %9 : vector<1x32x256xf32> to vector<32x256xf32>
    %11 = vector.shape_cast %8 : vector<32x256xf32> to vector<1x32x256xf32>
    tpu.vector_store %arg5[%c0_7, %c0_8, %c0_9], %11 {strides = array<i32>} : memref<1x32x256xf32, #tpu.memory_space<vmem>>, vector<1x32x256xf32>,
    return
  }
  func.func @transform_0(%arg0: i32, %arg1: i32) -> (i32, i32, i32) {
    %c0_i32 = arith.constant 0 : i32
    %c0_i32_0 = arith.constant 0 : i32
    return %arg0, %c0_i32, %arg1 : i32, i32, i32
  }
  func.func @transform_1(%arg0: i32, %arg1: i32) -> (i32, i32) {
    %c0_i32 = arith.constant 0 : i32
    %c0_i32_0 = arith.constant 0 : i32
    %c0_i32_1 = arith.constant 0 : i32
    return %c0_i32, %c0_i32_0 : i32, i32
  }
  func.func @transform_2(%arg0: i32, %arg1: i32) -> (i32, i32) {
    %c0_i32 = arith.constant 0 : i32
    %c0_i32_0 = arith.constant 0 : i32
    %c0_i32_1 = arith.constant 0 : i32
    return %c0_i32, %c0_i32_0 : i32, i32
  }
  func.func @transform_3(%arg0: i32, %arg1: i32) -> (i32, i32, i32) {
    %c0_i32 = arith.constant 0 : i32
    %c0_i32_0 = arith.constant 0 : i32
    return %arg0, %c0_i32, %arg1 : i32, i32, i32
  }
}

</mosaic_0001>

<llo_original>
// kernel: fused_conv_sub_relu.1
$region0: #{fused_conv_sub_relu.1}
  #allocation0 [shape = 'u32[]', space=smem, size = 0x4, offset = 0x4, fixed_abs, tag = 'smem constant byte address 0x4 - core index']
  #allocation1 [shape = 'u32[144,128]{1,0:T(1,128)}', space=vmem, size = 0x12000, scoped, tag = 'internal scratch']
  %s0 = inlined_call_operand.vmem [shape: f32[2,75,256], index: 0, kind: input, shape index: {}]
  %s1 = inlined_call_operand.vmem [shape: f32[32,75], index: 1, kind: input, shape index: {}]
  %s2 = inlined_call_operand.vmem [shape: f32[32,1], index: 2, kind: input, shape index: {}]
  %s3 = inlined_call_operand.vmem [shape: f32[2,32,256], index: 3, kind: output, shape index: {}]
  %s4 = sld [smem:[#allocation0]]
  $region45: #{fused_conv_sub_relu.1} parent=0
    _
  %s6 = ssub.s32 1, %s4
  %s7 = scalar_select 0, %s6, %s4
  loop: start=0, step=1, limit=4
  $region2: #{fused_conv_sub_relu.1} parent=0 // loop_pre_header
    _
  $region3: #{fused_conv_sub_relu.1} parent=0 // loop_header
    %s9 = sphi 0, %s13
    %p10 = scmp.ge.s32.totalorder %s9, 4
    %s16 = sphi 0, %s28
    %s17 = sphi 0, %s24
    %s18 = sphi 0, %s16
    %s19 = sphi 0, %s17
    %s20 = sphi 0, %s18
    %s21 = sphi 0, %s19
    %s33 = sphi 0, %s35
    %s36 = sphi 0, %s33
    %s37 = sphi 0, %s36
    %s53 = sphi 0, %s37
    %s57 = sphi 0, %s57
    %s59 = sphi 0, %s57
    %s60 = sphi 0, %s59
    %s74 = sphi 0, %s60
    %s78 = sphi 0, %s78
    %s80 = sphi 0, %s78
    %s81 = sphi 0, %s80
    %s95 = sphi 0, %s81
    %s103 = sphi 0, %s105
    %s106 = sphi 0, %s103
    %s107 = sphi 0, %s106
    %s123 = sphi 0, %s107
  $region4: #{fused_conv_sub_relu.1} parent=0 // loop_header_branch
    %12 = sbr.rel (%p10) target = $region8
  $region5: #{fused_conv_sub_relu.1} parent=0 // loop_body
    %s14 = ssub.s32 %s9, 1
    %s15 = ssub.s32 %s9, 2
    %s22 = sadd.s32 1, %s17
    %p23 = scmp.ge.s32.totalorder %s22, 1
    %s24 = scalar_select %p23, 0, %s22
    %s25 = sadd.s32 1, %s16
    %s26 = scalar_select %p23, %s25, %s16
    %p27 = scmp.ge.s32.totalorder %s26, 2
    %s28 = scalar_select %p27, 0, %s26
    %s29 = ssub.s32 %s16, %s28
    %s30 = ssub.s32 %s17, %s24
    %s31 = sor.u32 %s29, %s30
    %p32 = scmp.eq.s32.totalorder %s31, 0
    %s34 = sadd.s32 %s33, 1
    %s35 = scalar_select %p32, %s33, %s34
    %p38 = pneg %p32
    %p39 = scmp.eq.s32.totalorder %s9, 1
    %p40 = por %p38, %p39
    %p41 = scmp.ne.s32.totalorder %s33, %s36
    %p42 = scmp.eq.s32.totalorder %s9, 0
    %p43 = por %p41, %p42
    %p44 = scmp.ne.s32.totalorder %s33, %s36
    %p45 = scmp.eq.s32.totalorder %s14, 1
    %p46 = por %p44, %p45
    %p47 = scmp.ne.s32.totalorder %s36, %s37
    %p48 = scmp.eq.s32.totalorder %s14, 0
    %p49 = por %p47, %p48
    %p50 = scmp.ne.s32.totalorder %s36, %s37
    %p51 = scmp.eq.s32.totalorder %s15, 1
    %p52 = por %p50, %p51
    %p54 = scmp.ne.s32.totalorder %s37, %s53
    %p55 = scmp.eq.s32.totalorder %s15, 0
    %p56 = por %p54, %p55
    %s58 = sadd.s32 %s57, 1
    %p61 = scmp.eq.s32.totalorder %s9, 1
    %p62 = scmp.ne.s32.totalorder %s57, %s59
    %p63 = scmp.eq.s32.totalorder %s9, 0
    %p64 = por %p62, %p63
    %p65 = scmp.ne.s32.totalorder %s57, %s59
    %p66 = scmp.eq.s32.totalorder %s14, 1
    %p67 = por %p65, %p66
    %p68 = scmp.ne.s32.totalorder %s59, %s60
    %p69 = scmp.eq.s32.totalorder %s14, 0
    %p70 = por %p68, %p69
    %p71 = scmp.ne.s32.totalorder %s59, %s60
    %p72 = scmp.eq.s32.totalorder %s15, 1
    %p73 = por %p71, %p72
    %p75 = scmp.ne.s32.totalorder %s60, %s74
    %p76 = scmp.eq.s32.totalorder %s15, 0
    %p77 = por %p75, %p76
    %s79 = sadd.s32 %s78, 1
    %p82 = scmp.eq.s32.totalorder %s9, 1
    %p83 = scmp.ne.s32.totalorder %s78, %s80
    %p84 = scmp.eq.s32.totalorder %s9, 0
    %p85 = por %p83, %p84
    %p86 = scmp.ne.s32.totalorder %s78, %s80
    %p87 = scmp.eq.s32.totalorder %s14, 1
    %p88 = por %p86, %p87
    %p89 = scmp.ne.s32.totalorder %s80, %s81
    %p90 = scmp.eq.s32.totalorder %s14, 0
    %p91 = por %p89, %p90
    %p92 = scmp.ne.s32.totalorder %s80, %s81
    %p93 = scmp.eq.s32.totalorder %s15, 1
    %p94 = por %p92, %p93
    %p96 = scmp.ne.s32.totalorder %s81, %s95
    %p97 = scmp.eq.s32.totalorder %s15, 0
    %p98 = por %p96, %p97
    %s99 = ssub.s32 %s16, %s28
    %s100 = ssub.s32 %s17, %s24
    %s101 = sor.u32 %s99, %s100
    %p102 = scmp.eq.s32.totalorder %s101, 0
    %s104 = sadd.s32 %s103, 1
    %s105 = scalar_select %p102, %s103, %s104
    %p108 = pneg %p102
    %p109 = scmp.eq.s32.totalorder %s9, 1
    %p110 = por %p108, %p109
    %p111 = scmp.ne.s32.totalorder %s103, %s106
    %p112 = scmp.eq.s32.totalorder %s9, 0
    %p113 = por %p111, %p112
    %p114 = scmp.ne.s32.totalorder %s103, %s106
    %p115 = scmp.eq.s32.totalorder %s14, 1
    %p116 = por %p114, %p115
    %p117 = scmp.ne.s32.totalorder %s106, %s107
    %p118 = scmp.eq.s32.totalorder %s14, 0
    %p119 = por %p117, %p118
    %p120 = scmp.ne.s32.totalorder %s106, %s107
    %p121 = scmp.eq.s32.totalorder %s15, 1
    %p122 = por %p120, %p121
    %p124 = scmp.ne.s32.totalorder %s107, %s123
    %p125 = scmp.eq.s32.totalorder %s15, 0
    %p126 = por %p124, %p125
    %p127 = scmp.le.s32.totalorder 1, %s9
    %p128 = scmp.lt.s32.totalorder %s9, 3
    %p129 = pnand %p127, %p128
    %p130 = pneg %p129
    // Predicated region
    $region9: #{fused_conv_sub_relu.1} parent=5 // pred_check
      _
    $region10: #{fused_conv_sub_relu.1} parent=5 // pred_check_branch
      %132 = sbr.rel (%p129) target = $region12
    $region11: #{fused_conv_sub_relu.1} parent=5 // pred_region
      %s133 = ssub.s32 %s9, 1
      // Predicated region
      $region13: #{fused_conv_sub_relu.1} parent=11 // pred_check
        %p134 = pneg %p70
      $region14: #{fused_conv_sub_relu.1} parent=11 // pred_check_branch
        %136 = sbr.rel (%p134) target = $region16
      $region15: #{fused_conv_sub_relu.1} parent=11 // pred_region
        _
      $region16: #{fused_conv_sub_relu.1} parent=11 // pred_fallthru
        _
      // Predicated region
      $region17: #{fused_conv_sub_relu.1} parent=11 // pred_check
        %p137 = pneg %p91
      $region18: #{fused_conv_sub_relu.1} parent=11 // pred_check_branch
        %139 = sbr.rel (%p137) target = $region20
      $region19: #{fused_conv_sub_relu.1} parent=11 // pred_region
        _
      $region20: #{fused_conv_sub_relu.1} parent=11 // pred_fallthru
        _
    $region12: #{fused_conv_sub_relu.1} parent=5 // pred_fallthru
      _
    %p140 = scmp.lt.s32.totalorder %s9, 2
    // Predicated region
    $region21: #{fused_conv_sub_relu.1} parent=5 // pred_check
      %p141 = pneg %p140
    $region22: #{fused_conv_sub_relu.1} parent=5 // pred_check_branch
      %143 = sbr.rel (%p141) target = $region24
    $region23: #{fused_conv_sub_relu.1} parent=5 // pred_region
      // Predicated region
      $region25: #{fused_conv_sub_relu.1} parent=23 // pred_check
        %p144 = pneg %p43
      $region26: #{fused_conv_sub_relu.1} parent=23 // pred_check_branch
        %146 = sbr.rel (%p144) target = $region28
      $region27: #{fused_conv_sub_relu.1} parent=23 // pred_region
        %s147 = smul.u32 2, %s17
        %p148 = scmp.lt.s32.totalorder %s16, 1
        %s149 = scalar_select %p148, %s16, 1
        %p150 = scmp.lt.s32.totalorder %s147, 1
        %s151 = scalar_select %p150, %s147, 1
        %s152 = smul.addr %s149, 20
        %s153 = sadd.s32 %s151, %s152
        %s154 = smul.addr %s153, 8
        %s155 = scalar_lea.vmem %s0, %s154
        %s156 = smul.u32 2, %s17
      $region28: #{fused_conv_sub_relu.1} parent=23 // pred_fallthru
        _
    $region24: #{fused_conv_sub_relu.1} parent=5 // pred_fallthru
      _
    %p157 = scmp.le.s32.totalorder 1, %s9
    %p158 = scmp.lt.s32.totalorder %s9, 3
    %p159 = pnand %p157, %p158
    %p160 = pneg %p159
    // Predicated region
    $region29: #{fused_conv_sub_relu.1} parent=5 // pred_check
      _
    $region30: #{fused_conv_sub_relu.1} parent=5 // pred_check_branch
      %162 = sbr.rel (%p159) target = $region32
    $region31: #{fused_conv_sub_relu.1} parent=5 // pred_region
      %s163 = ssub.s32 %s9, 1
      %s164 = smul.u32 2, %s19
      %p165 = scmp.lt.s32.totalorder %s18, 1
      %s166 = scalar_select %p165, %s18, 1
      %p167 = scmp.lt.s32.totalorder %s164, 1
      %s168 = scalar_select %p167, %s164, 1
      %s169 = smul.addr %s166, 20
      %s170 = sadd.s32 %s168, %s169
      %s171 = smul.addr %s170, 8
      %s172 = scalar_lea.vmem %s0, %s171
      %p173 = pneg %p49
      %p174 = pneg %p46
      %p175 = pneg %p70
      %p176 = pneg %p67
      %p177 = pneg %p91
      %p178 = pneg %p88
      %p179 = pneg %p119
      %p180 = pneg %p116
      %s181 = smul.u32 2, %s19
      %p182 = scmp.lt.s32.totalorder %s18, 1
      %s183 = scalar_select %p182, %s18, 1
      %p184 = scmp.lt.s32.totalorder %s181, 1
      %s185 = scalar_select %p184, %s181, 1
      %s186 = smul.addr %s183, 8
      %s187 = sadd.s32 %s185, %s186
      %s188 = smul.addr %s187, 8
      %s189 = scalar_lea.vmem %s3, %s188
      %s190 = smul.u32 2, %s19
      %p191 = scmp.lt.s32.totalorder %s18, 1
      %s192 = scalar_select %p191, %s18, 1
      %p193 = scmp.lt.s32.totalorder %s190, 1
      %s194 = scalar_select %p193, %s190, 1
      %s195 = smul.addr %s192, 20
      %s196 = sadd.s32 %s194, %s195
      %s197 = smul.addr %s196, 8
      %s198 = scalar_lea.vmem %s0, %s197
      %s199 = smul.u32 2, %s19
      %s200 = smul.u32 2, %s19
      %p201 = scmp.lt.s32.totalorder %s18, 1
      %s202 = scalar_select %p201, %s18, 1
      %p203 = scmp.lt.s32.totalorder %s200, 1
      %s204 = scalar_select %p203, %s200, 1
      %s205 = smul.addr %s202, 8
      %s206 = sadd.s32 %s204, %s205
      %s207 = smul.addr %s206, 8
      %s208 = scalar_lea.vmem %s3, %s207
      %s209 = smul.u32 2, %s19
      %v210 = vld [vmem:[%s1] sm:$0xff]
      %v211 = vld [vmem:[%s1 + $0x8] sm:$0xff]
      %v212 = vld [vmem:[%s1 + $0x10] sm:$0xff]
      %v213 = vld [vmem:[%s1 + $0x18] sm:$0xff]
      %v214 = vld [vmem:[%s198] sm:$0xff]
      %v215 = vld [vmem:[%s198 + $0x8] sm:$0xff]
      %v216 = vld [vmem:[%s198 + $0x10] sm:$0xff]
      %v217 = vld [vmem:[%s198 + $0x18] sm:$0xff]
      %v218 = vld [vmem:[%s198 + $0x20] sm:$0xff]
      %v219 = vld [vmem:[%s198 + $0x28] sm:$0xff]
      %v220 = vld [vmem:[%s198 + $0x30] sm:$0xff]
      %v221 = vld [vmem:[%s198 + $0x38] sm:$0xff]
      %v222 = vld [vmem:[%s198 + $0x40] sm:$0xff]
      %v223 = vld [vmem:[%s198 + $0x48] sm:$0xff]
      %v224 = vld [vmem:[%s198 + $0x50] sm:$0xff]
      %v225 = vld [vmem:[%s198 + $0x58] sm:$0xff]
      %v226 = vld [vmem:[%s198 + $0x60] sm:$0xff]
      %v227 = vld [vmem:[%s198 + $0x68] sm:$0xff]
      %v228 = vld [vmem:[%s198 + $0x70] sm:$0xff]
      %v229 = vld [vmem:[%s198 + $0x78] sm:$0xff]
      %v230 = vld [vmem:[%s198 + $0x80] sm:$0xff]
      %v231 = vld [vmem:[%s198 + $0x88] sm:$0xff]
      %v232 = vld [vmem:[%s198 + $0x90] sm:$0x7]
      %v233 = vld [vmem:[%s198 + $0x98] sm:$0x7]
      %v234 = vld [vmem:[%s2] sm:$0xff]
      %v235 = vld [vmem:[%s2 + $0x8] sm:$0xff]
      %v236 = vld [vmem:[%s2 + $0x10] sm:$0xff]
      %v237 = vld [vmem:[%s2 + $0x18] sm:$0xff]
      %239 = vset.pattern.permute.xlu0 0
      %240 = vperm.xlu0 %239, %v234
      %v241 = vpop.permute.xlu0 %240
      %244 = vset.pattern.permute.xlu0 0
      %245 = vperm.xlu0 %244, %v235
      %v246 = vpop.permute.xlu0 %245
      %249 = vset.pattern.permute.xlu0 0
      %250 = vperm.xlu0 %249, %v236
      %v251 = vpop.permute.xlu0 %250
      %254 = vset.pattern.permute.xlu0 0
      %255 = vperm.xlu0 %254, %v237
      %v256 = vpop.permute.xlu0 %255
      %vm258 = vcmask 613376
      %v260 = vsel %vm258, %v210, 0
      %v263 = vsel %vm258, %v211, 0
      %v266 = vsel %vm258, %v212, 0
      %v269 = vsel %vm258, %v213, 0
      %vm271 = vcmask 1042432
      %v273 = vsel %vm271, %v232, 0
      %v276 = vsel %vm271, %v233, 0
      %278 = vmatprep.subr.mxu0 0.0
      %279 = vmatpush1.msra.mxu0 0.0
      %280 = vmatprep.subr.mxu0 0.0
      %281 = vmatpush1.msra.mxu0 0.0
      %282 = vmatprep.subr.mxu0 0.0
      %283 = vmatpush1.msra.mxu0 0.0
      %284 = vmatprep.subr.mxu0 0.0
      %285 = vmatpush1.msra.mxu0 0.0
      %286 = vmatprep.subr.mxu0 0.0
      %287 = vmatpush1.msra.mxu0 0.0
      %288 = vmatprep.subr.mxu0 0.0
      %289 = vmatpush1.msra.mxu0 0.0
      %290 = vmatprep.subr.mxu0 %v276
      %291 = vmatpush1.msra.mxu0 %v273
      %292 = vmatprep.subr.mxu0 %v231
      %293 = vmatpush1.msra.mxu0 %v230
      %294 = vmatprep.subr.mxu0 %v229
      %295 = vmatpush1.msra.mxu0 %v228
      %296 = vmatprep.subr.mxu0 %v227
      %297 = vmatpush1.msra.mxu0 %v226
      %298 = vmatprep.subr.mxu0 %v225
      %299 = vmatpush1.msra.mxu0 %v224
      %300 = vmatprep.subr.mxu0 %v223
      %301 = vmatpush1.msra.mxu0 %v222
      %302 = vmatprep.subr.mxu0 %v221
      %303 = vmatpush1.msra.mxu0 %v220
      %304 = vmatprep.subr.mxu0 %v219
      %305 = vmatpush1.msra.mxu0 %v218
      %306 = vmatprep.subr.mxu0 %v217
      %307 = vmatpush1.msra.mxu0 %v216
      %308 = vmatprep.subr.mxu0 %v215
      %309 = vmatpush1.msra.mxu0 %v214
      %310 = vmatprep.subr.mxu0 0.0
      %311 = vmatpush2.msra.mxu0 0.0
      %312 = vmatprep.subr.mxu0 0.0
      %313 = vmatpush2.msra.mxu0 0.0
      %314 = vmatprep.subr.mxu0 0.0
      %315 = vmatpush2.msra.mxu0 0.0
      %316 = vmatprep.subr.mxu0 0.0
      %317 = vmatpush2.msra.mxu0 0.0
      %318 = vmatprep.subr.mxu0 0.0
      %319 = vmatpush2.msra.mxu0 0.0
      %320 = vmatprep.subr.mxu0 0.0
      %321 = vmatpush2.msra.mxu0 0.0
      %322 = vmatprep.subr.mxu0 0.0
      %323 = vmatpush2.msra.mxu0 0.0
      %324 = vmatprep.subr.mxu0 0.0
      %325 = vmatpush2.msra.mxu0 0.0
      %326 = vmatprep.subr.mxu0 0.0
      %327 = vmatpush2.msra.mxu0 0.0
      %328 = vmatprep.subr.mxu0 0.0
      %329 = vmatpush2.msra.mxu0 0.0
      %330 = vmatprep.subr.mxu0 0.0
      %331 = vmatpush2.msra.mxu0 0.0
      %332 = vmatprep.subr.mxu0 0.0
      %333 = vmatpush2.msra.mxu0 0.0
      %334 = vmatprep.subr.mxu0 0.0
      %335 = vmatpush2.msra.mxu0 0.0
      %336 = vmatprep.subr.mxu0 0.0
      %337 = vmatpush2.msra.mxu0 0.0
      %338 = vmatprep.subr.mxu0 0.0
      %339 = vmatpush2.msra.mxu0 0.0
      %340 = vmatprep.subr.mxu0 0.0
      %341 = vmatpush2.msra.mxu0 0.0
      %342 = vmatprep.mubr.f32.mxu0 0.0
      %343 = vmatmul.mubr.f32.gmra.mxu0 %v260
      %v344 = vpop.f32.mrf.mxu0
      %v345 = vadd.f32 %v241, %v344
      %v346 = vpop.f32.mrf.mxu0
      %v347 = vadd.f32 %v241, %v346
      %348 = vmatprep.mubr.f32.mxu0 0.0
      %349 = vmatmul.mubr.f32.gmra.mxu0 %v263
      %v350 = vpop.f32.mrf.mxu0
      %v351 = vadd.f32 %v246, %v350
      %v352 = vpop.f32.mrf.mxu0
      %v353 = vadd.f32 %v246, %v352
      %354 = vmatprep.mubr.f32.mxu0 0.0
      %355 = vmatmul.mubr.f32.gmra.mxu0 %v266
      %v356 = vpop.f32.mrf.mxu0
      %v357 = vadd.f32 %v251, %v356
      %v358 = vpop.f32.mrf.mxu0
      %v359 = vadd.f32 %v251, %v358
      %360 = vmatprep.mubr.f32.mxu0 0.0
      %361 = vmatmul.mubr.f32.gmra.mxu0 %v269
      %v362 = vpop.f32.mrf.mxu0
      %v363 = vadd.f32 %v256, %v362
      %v364 = vpop.f32.mrf.mxu0
      %v365 = vadd.f32 %v256, %v364
      %366 = vdwg.mxu0
      %v367 = vmax.f32 %v345, 0.0
      %v368 = vmax.f32 %v347, 0.0
      %v369 = vmax.f32 %v351, 0.0
      %v370 = vmax.f32 %v353, 0.0
      %v371 = vmax.f32 %v357, 0.0
      %v372 = vmax.f32 %v359, 0.0
      %v373 = vmax.f32 %v363, 0.0
      %v374 = vmax.f32 %v365, 0.0
      %375 = vst [vmem:[%s208] sm:$0xff] %v367
      %376 = vst [vmem:[%s208 + $0x8] sm:$0xff] %v368
      %377 = vst [vmem:[%s208 + $0x10] sm:$0xff] %v369
      %378 = vst [vmem:[%s208 + $0x18] sm:$0xff] %v370
      %379 = vst [vmem:[%s208 + $0x20] sm:$0xff] %v371
      %380 = vst [vmem:[%s208 + $0x28] sm:$0xff] %v372
      %381 = vst [vmem:[%s208 + $0x30] sm:$0xff] %v373
      %382 = vst [vmem:[%s208 + $0x38] sm:$0xff] %v374
      %s383 = smul.u32 2, %s19
      %p384 = scmp.lt.s32.totalorder %s18, 1
      %s385 = scalar_select %p384, %s18, 1
      %p386 = scmp.lt.s32.totalorder %s383, 1
      %s387 = scalar_select %p386, %s383, 1
      %s388 = smul.addr %s385, 8
      %s389 = sadd.s32 %s387, %s388
      %s390 = smul.addr %s389, 8
      %s391 = scalar_lea.vmem %s3, %s390
      // Predicated region
      $region33: #{fused_conv_sub_relu.1} parent=31 // pred_check
        %p392 = pneg %p116
      $region34: #{fused_conv_sub_relu.1} parent=31 // pred_check_branch
        %394 = sbr.rel (%p392) target = $region36
      $region35: #{fused_conv_sub_relu.1} parent=31 // pred_region
        %s395 = smul.u32 2, %s19
      $region36: #{fused_conv_sub_relu.1} parent=31 // pred_fallthru
        _
    $region32: #{fused_conv_sub_relu.1} parent=5 // pred_fallthru
      _
    %p396 = scmp.le.s32.totalorder 2, %s9
    // Predicated region
    $region37: #{fused_conv_sub_relu.1} parent=5 // pred_check
      %p397 = pneg %p396
    $region38: #{fused_conv_sub_relu.1} parent=5 // pred_check_branch
      %399 = sbr.rel (%p397) target = $region40
    $region39: #{fused_conv_sub_relu.1} parent=5 // pred_region
      %s400 = ssub.s32 %s9, 2
      // Predicated region
      $region41: #{fused_conv_sub_relu.1} parent=39 // pred_check
        %p401 = pneg %p122
      $region42: #{fused_conv_sub_relu.1} parent=39 // pred_check_branch
        %403 = sbr.rel (%p401) target = $region44
      $region43: #{fused_conv_sub_relu.1} parent=39 // pred_region
        %s404 = smul.u32 2, %s21
        %p405 = scmp.lt.s32.totalorder %s20, 1
        %s406 = scalar_select %p405, %s20, 1
        %p407 = scmp.lt.s32.totalorder %s404, 1
        %s408 = scalar_select %p407, %s404, 1
        %s409 = smul.addr %s406, 8
        %s410 = sadd.s32 %s408, %s409
        %s411 = smul.addr %s410, 8
        %s412 = scalar_lea.vmem %s3, %s411
      $region44: #{fused_conv_sub_relu.1} parent=39 // pred_fallthru
        _
    $region40: #{fused_conv_sub_relu.1} parent=5 // pred_fallthru
      _
  $region6: #{fused_conv_sub_relu.1} parent=0 // loop_footer
    %s13 = sadd.s32 1, %s9
  $region7: #{fused_conv_sub_relu.1} parent=0 // loop_footer_branch
    %8 = sbr.rel target = $region3
  $region8: #{fused_conv_sub_relu.1} parent=0 // loop_exit
    _

</llo_original>
